<compile_context>
chip_gen: v5e
topology: v5e:2x2
jax: 0.10.0
libtpu: 0.0.40
codegen_flags: <defaults>
</compile_context>

<pallas_src>
import jax
import jax.numpy as jnp
from jax.experimental import pallas as pl
from jax.experimental.pallas import tpu as pltpu


HIDDEN_DIMS = (64, 128, 64)
OUTPUT_DIM = 3


def _mlp_kernel(x_ref, w1_ref, b1_ref, w2_ref, b2_ref, w3_ref, b3_ref,
                w4_ref, b4_ref, o_ref):
    """Fused 4-layer MLP.

    Matmuls take bf16 operands on the MXU with f32 accumulation; bias add and
    ReLU run in f32 on the VPU. Dropout(0.1) = identity (eval semantics).
    """
    x = x_ref[...]                                                  # (bm, d_in) bf16

    h = jnp.dot(x, w1_ref[...], preferred_element_type=jnp.float32) + b1_ref[...]
    h = jnp.maximum(h, 0.0)

    h = jnp.dot(h.astype(jnp.bfloat16), w2_ref[...],
                preferred_element_type=jnp.float32) + b2_ref[...]
    h = jnp.maximum(h, 0.0)

    h = jnp.dot(h.astype(jnp.bfloat16), w3_ref[...],
                preferred_element_type=jnp.float32) + b3_ref[...]
    h = jnp.maximum(h, 0.0)

    out = jnp.dot(h.astype(jnp.bfloat16), w4_ref[...],
                  preferred_element_type=jnp.float32) + b4_ref[...]
    # Output last dim is 3 (< 128 lanes) -> masked stores. Padding w4/b4 to 128
    # columns would give unmasked vst at 42x the output bytes; only worth it if
    # profiling shows a store-slot bottleneck, so keep the narrow store here.
    o_ref[...] = out.astype(o_ref.dtype)


def _choose_block_m(B, block_m):
    """Large MXU-filling batch tile, but keep >=2 grid steps and 8-row alignment."""
    if B <= 16:
        return B                      # single full-extent tile (always legal)
    bm = min(block_m, pl.cdiv(B, 2))  # >= 2 grid steps -> both v7x TCs get work
    bm = max(8, (bm // 8) * 8)        # sublane-aligned
    return bm


def malliavin_mlp_forward(x, params, *, block_m=256, use_pallas=None):
    """Run the fused MLP forward pass.

    x:      (B, input_dim) float32
    params: dict with w1,b1,...,w4,b4 (weights (in, out) f32, biases (1, out) f32)
    """
    B, d_in = x.shape
    if use_pallas is None:
        use_pallas = B > 64           # tiny batches: fixed kernel overhead dominates
    if not use_pallas:
        return reference_forward(x, params)

    # bf16 matmul operands (halves HBM read traffic, bf16-native MXU); f32 biases.
    xb = x.astype(jnp.bfloat16)
    w1, w2, w3, w4 = (params[f"w{i}"].astype(jnp.bfloat16) for i in (1, 2, 3, 4))
    b1, b2, b3, b4 = (params[f"b{i}"].astype(jnp.float32) for i in (1, 2, 3, 4))

    bm = _choose_block_m(B, block_m)
    grid = (pl.cdiv(B, bm),)

    def full_spec(shape):
        # Whole parameter resident in VMEM; constant block index -> no re-DMA
        # across grid steps (block is revisited, total weights < 100 KB).
        return pl.BlockSpec(shape, lambda i: tuple(0 for _ in shape))

    flops = 2 * B * (d_in * HIDDEN_DIMS[0]
                     + HIDDEN_DIMS[0] * HIDDEN_DIMS[1]
                     + HIDDEN_DIMS[1] * HIDDEN_DIMS[2]
                     + HIDDEN_DIMS[2] * OUTPUT_DIM)
    param_bytes = sum(int(a.size) * a.dtype.itemsize
                      for a in (w1, w2, w3, w4, b1, b2, b3, b4))
    bytes_accessed = int(xb.size) * xb.dtype.itemsize + B * OUTPUT_DIM * 4 + param_bytes
    cost = pl.CostEstimate(flops=flops, transcendentals=0,
                           bytes_accessed=bytes_accessed)

    out_shape = jax.ShapeDtypeStruct((B, OUTPUT_DIM), jnp.float32)

    return pl.pallas_call(
        _mlp_kernel,
        out_shape=out_shape,
        grid_spec=pltpu.PrefetchScalarGridSpec(
            num_scalar_prefetch=0,
            grid=grid,
            in_specs=[
                pl.BlockSpec((bm, d_in), lambda i: (i, 0)),   # x tile over batch
                full_spec(w1.shape), full_spec(b1.shape),
                full_spec(w2.shape), full_spec(b2.shape),
                full_spec(w3.shape), full_spec(b3.shape),
                full_spec(w4.shape), full_spec(b4.shape),
            ],
            out_specs=pl.BlockSpec((bm, OUTPUT_DIM), lambda i: (i, 0)),
        ),
        compiler_params=pltpu.CompilerParams(
            dimension_semantics=("parallel",),   # batch axis shards across TCs
        ),
        cost_estimate=cost,
    )(xb, w1, b1, w2, b2, w3, b3, w4, b4)


def init_params(key, input_dim, hidden_dims=HIDDEN_DIMS, output_dim=OUTPUT_DIM):
    """Deterministic xavier_uniform weights, zero biases (matches PyTorch init)."""
    dims = [input_dim, *hidden_dims, output_dim]
    params = {}
    for idx in range(len(dims) - 1):
        fan_in, fan_out = dims[idx], dims[idx + 1]
        key, sub = jax.random.split(key)
        bound = (6.0 / (fan_in + fan_out)) ** 0.5
        w = jax.random.uniform(sub, (fan_in, fan_out), jnp.float32,
                               minval=-bound, maxval=bound)
        b = jnp.zeros((1, fan_out), jnp.float32)
        params[f"w{idx + 1}"] = w
        params[f"b{idx + 1}"] = b
    return params


def reference_forward(x, params):
    """Pure-JAX f32 reference for correctness check (and small-batch fallback)."""
    h = x
    for i in (1, 2, 3):
        h = jnp.maximum(h @ params[f"w{i}"] + params[f"b{i}"], 0.0)
    return h @ params["w4"] + params["b4"]


if __name__ == "__main__":
    key = jax.random.PRNGKey(0)
    key, kx = jax.random.split(key)

    batch, input_dim = 256, 16
    x = jax.random.normal(kx, (batch, input_dim), jnp.float32)

    params = init_params(key, input_dim)

    out = malliavin_mlp_forward(x, params, use_pallas=True)
    out = jax.block_until_ready(out)

    ref = reference_forward(x, params)
    assert out.shape == (batch, OUTPUT_DIM)
    # bf16 matmul operands with f32 accumulation -> loosen tolerance vs f32 reference.
    assert jnp.allclose(out, ref, atol=5e-2, rtol=5e-2), "mismatch vs JAX reference"

    print("KERNEL_OK")
</pallas_src>

<mosaic_0001>
module attributes {stable_mosaic.version = 11 : i64} {
  func.func @_mlp_kernel(%arg0: i32, %arg1: memref<128x16xbf16, #tpu.memory_space<vmem>>, %arg2: memref<16x64xbf16, #tpu.memory_space<vmem>>, %arg3: memref<1x64xf32, #tpu.memory_space<vmem>>, %arg4: memref<64x128xbf16, #tpu.memory_space<vmem>>, %arg5: memref<1x128xf32, #tpu.memory_space<vmem>>, %arg6: memref<128x64xbf16, #tpu.memory_space<vmem>>, %arg7: memref<1x64xf32, #tpu.memory_space<vmem>>, %arg8: memref<64x3xbf16, #tpu.memory_space<vmem>>, %arg9: memref<1x3xf32, #tpu.memory_space<vmem>>, %arg10: memref<128x3xf32, #tpu.memory_space<vmem>>) attributes {dimension_semantics = [#tpu.dimension_semantics<parallel>], iteration_bounds = array<i64: 2>, scalar_prefetch = 0 : i64, scratch_operands = 0 : i64, tpu.core_type = #tpu.core_type<tc>, window_params = [{transform_indices = @transform_0, window_bounds = array<i64: 128, 16>}, {pipeline_mode = #tpu.pipeline_mode<synchronous>, transform_indices = @transform_1, window_bounds = array<i64: 16, 64>}, {pipeline_mode = #tpu.pipeline_mode<synchronous>, transform_indices = @transform_2, window_bounds = array<i64: 1, 64>}, {pipeline_mode = #tpu.pipeline_mode<synchronous>, transform_indices = @transform_3, window_bounds = array<i64: 64, 128>}, {pipeline_mode = #tpu.pipeline_mode<synchronous>, transform_indices = @transform_4, window_bounds = array<i64: 1, 128>}, {pipeline_mode = #tpu.pipeline_mode<synchronous>, transform_indices = @transform_5, window_bounds = array<i64: 128, 64>}, {pipeline_mode = #tpu.pipeline_mode<synchronous>, transform_indices = @transform_6, window_bounds = array<i64: 1, 64>}, {pipeline_mode = #tpu.pipeline_mode<synchronous>, transform_indices = @transform_7, window_bounds = array<i64: 64, 3>}, {pipeline_mode = #tpu.pipeline_mode<synchronous>, transform_indices = @transform_8, window_bounds = array<i64: 1, 3>}, {transform_indices = @transform_9, window_bounds = array<i64: 128, 3>}]} {
    %c0 = arith.constant 0 : index
    %c0_0 = arith.constant 0 : index
    %0 = vector.load %arg1[%c0, %c0_0] : memref<128x16xbf16, #tpu.memory_space<vmem>>, vector<128x16xbf16>
    %c0_1 = arith.constant 0 : index
    %c0_2 = arith.constant 0 : index
    %1 = vector.load %arg2[%c0_1, %c0_2] : memref<16x64xbf16, #tpu.memory_space<vmem>>, vector<16x64xbf16>
    %cst = arith.constant dense<0.000000e+00> : vector<128x64xf32>
    %2 = tpu.matmul %0, %1, %cst {dimension_numbers = #tpu.dot_dimension_numbers<[1], [0], [0], [1], [0, 0, 1, 1], [], []>} : vector<128x16xbf16>, vector<16x64xbf16>, vector<128x64xf32> -> vector<128x64xf32>
    %c0_3 = arith.constant 0 : index
    %c0_4 = arith.constant 0 : index
    %3 = vector.load %arg3[%c0_3, %c0_4] : memref<1x64xf32, #tpu.memory_space<vmem>>, vector<1x64xf32>
    %4 = vector.broadcast %3 : vector<1x64xf32> to vector<128x64xf32>
    %5 = arith.addf %2, %4 : vector<128x64xf32>
    %cst_5 = arith.constant 0.000000e+00 : f32
    %6 = vector.broadcast %cst_5 : f32 to vector<128x64xf32>
    %7 = arith.maximumf %5, %6 : vector<128x64xf32>
    %8 = arith.truncf %7 : vector<128x64xf32> to vector<128x64xbf16>
    %c0_6 = arith.constant 0 : index
    %c0_7 = arith.constant 0 : index
    %9 = vector.load %arg4[%c0_6, %c0_7] : memref<64x128xbf16, #tpu.memory_space<vmem>>, vector<64x128xbf16>
    %cst_8 = arith.constant dense<0.000000e+00> : vector<128x128xf32>
    %10 = tpu.matmul %8, %9, %cst_8 {dimension_numbers = #tpu.dot_dimension_numbers<[1], [0], [0], [1], [0, 0, 1, 1], [], []>} : vector<128x64xbf16>, vector<64x128xbf16>, vector<128x128xf32> -> vector<128x128xf32>
    %c0_9 = arith.constant 0 : index
    %c0_10 = arith.constant 0 : index
    %11 = vector.load %arg5[%c0_9, %c0_10] : memref<1x128xf32, #tpu.memory_space<vmem>>, vector<1x128xf32>
    %12 = vector.broadcast %11 : vector<1x128xf32> to vector<128x128xf32>
    %13 = arith.addf %10, %12 : vector<128x128xf32>
    %cst_11 = arith.constant 0.000000e+00 : f32
    %14 = vector.broadcast %cst_11 : f32 to vector<128x128xf32>
    %15 = arith.maximumf %13, %14 : vector<128x128xf32>
    %16 = arith.truncf %15 : vector<128x128xf32> to vector<128x128xbf16>
    %c0_12 = arith.constant 0 : index
    %c0_13 = arith.constant 0 : index
    %17 = vector.load %arg6[%c0_12, %c0_13] : memref<128x64xbf16, #tpu.memory_space<vmem>>, vector<128x64xbf16>
    %cst_14 = arith.constant dense<0.000000e+00> : vector<128x64xf32>
    %18 = tpu.matmul %16, %17, %cst_14 {dimension_numbers = #tpu.dot_dimension_numbers<[1], [0], [0], [1], [0, 0, 1, 1], [], []>} : vector<128x128xbf16>, vector<128x64xbf16>, vector<128x64xf32> -> vector<128x64xf32>
    %c0_15 = arith.constant 0 : index
    %c0_16 = arith.constant 0 : index
    %19 = vector.load %arg7[%c0_15, %c0_16] : memref<1x64xf32, #tpu.memory_space<vmem>>, vector<1x64xf32>
    %20 = vector.broadcast %19 : vector<1x64xf32> to vector<128x64xf32>
    %21 = arith.addf %18, %20 : vector<128x64xf32>
    %cst_17 = arith.constant 0.000000e+00 : f32
    %22 = vector.broadcast %cst_17 : f32 to vector<128x64xf32>
    %23 = arith.maximumf %21, %22 : vector<128x64xf32>
    %24 = arith.truncf %23 : vector<128x64xf32> to vector<128x64xbf16>
    %c0_18 = arith.constant 0 : index
    %c0_19 = arith.constant 0 : index
    %25 = vector.load %arg8[%c0_18, %c0_19] : memref<64x3xbf16, #tpu.memory_space<vmem>>, vector<64x3xbf16>
    %cst_20 = arith.constant dense<0.000000e+00> : vector<128x3xf32>
    %26 = tpu.matmul %24, %25, %cst_20 {dimension_numbers = #tpu.dot_dimension_numbers<[1], [0], [0], [1], [0, 0, 1, 1], [], []>} : vector<128x64xbf16>, vector<64x3xbf16>, vector<128x3xf32> -> vector<128x3xf32>
    %c0_21 = arith.constant 0 : index
    %c0_22 = arith.constant 0 : index
    %27 = vector.load %arg9[%c0_21, %c0_22] : memref<1x3xf32, #tpu.memory_space<vmem>>, vector<1x3xf32>
    %28 = vector.broadcast %27 : vector<1x3xf32> to vector<128x3xf32>
    %29 = arith.addf %26, %28 : vector<128x3xf32>
    %c0_23 = arith.constant 0 : index
    %c0_24 = arith.constant 0 : index
    %30 = vector.load %arg10[%c0_23, %c0_24] : memref<128x3xf32, #tpu.memory_space<vmem>>, vector<128x3xf32>
    tpu.vector_store %arg10[%c0_23, %c0_24], %29 {strides = array<i32>} : memref<128x3xf32, #tpu.memory_space<vmem>>, vector<128x3xf32>,
    return
  }
  func.func @transform_0(%arg0: i32) -> (i32, i32) {
    %c0_i32 = arith.constant 0 : i32
    %c0_i32_0 = arith.constant 0 : i32
    return %arg0, %c0_i32 : i32, i32
  }
  func.func @transform_1(%arg0: i32) -> (i32, i32) {
    %c0_i32 = arith.constant 0 : i32
    %c0_i32_0 = arith.constant 0 : i32
    %c0_i32_1 = arith.constant 0 : i32
    return %c0_i32, %c0_i32_0 : i32, i32
  }
  func.func @transform_2(%arg0: i32) -> (i32, i32) {
    %c0_i32 = arith.constant 0 : i32
    %c0_i32_0 = arith.constant 0 : i32
    %c0_i32_1 = arith.constant 0 : i32
    return %c0_i32, %c0_i32_0 : i32, i32
  }
  func.func @transform_3(%arg0: i32) -> (i32, i32) {
    %c0_i32 = arith.constant 0 : i32
    %c0_i32_0 = arith.constant 0 : i32
    %c0_i32_1 = arith.constant 0 : i32
    return %c0_i32, %c0_i32_0 : i32, i32
  }
  func.func @transform_4(%arg0: i32) -> (i32, i32) {
    %c0_i32 = arith.constant 0 : i32
    %c0_i32_0 = arith.constant 0 : i32
    %c0_i32_1 = arith.constant 0 : i32
    return %c0_i32, %c0_i32_0 : i32, i32
  }
  func.func @transform_5(%arg0: i32) -> (i32, i32) {
    %c0_i32 = arith.constant 0 : i32
    %c0_i32_0 = arith.constant 0 : i32
    %c0_i32_1 = arith.constant 0 : i32
    return %c0_i32, %c0_i32_0 : i32, i32
  }
  func.func @transform_6(%arg0: i32) -> (i32, i32) {
    %c0_i32 = arith.constant 0 : i32
    %c0_i32_0 = arith.constant 0 : i32
    %c0_i32_1 = arith.constant 0 : i32
    return %c0_i32, %c0_i32_0 : i32, i32
  }
  func.func @transform_7(%arg0: i32) -> (i32, i32) {
    %c0_i32 = arith.constant 0 : i32
    %c0_i32_0 = arith.constant 0 : i32
    %c0_i32_1 = arith.constant 0 : i32
    return %c0_i32, %c0_i32_0 : i32, i32
  }
  func.func @transform_8(%arg0: i32) -> (i32, i32) {
    %c0_i32 = arith.constant 0 : i32
    %c0_i32_0 = arith.constant 0 : i32
    %c0_i32_1 = arith.constant 0 : i32
    return %c0_i32, %c0_i32_0 : i32, i32
  }
  func.func @transform_9(%arg0: i32) -> (i32, i32) {
    %c0_i32 = arith.constant 0 : i32
    %c0_i32_0 = arith.constant 0 : i32
    return %arg0, %c0_i32 : i32, i32
  }
}

</mosaic_0001>

<llo_original>
// kernel: tpu_custom_call.1
$region0: #{tpu_custom_call.1}
  #allocation0 [shape = 'u32[]', space=smem, size = 0x4, offset = 0x4, fixed_abs, tag = 'smem constant byte address 0x4 - core index']
  #allocation1 [shape = 'u32[72,128]{1,0:T(1,128)}', space=vmem, size = 0x9000, scoped, tag = 'internal scratch']
  %s0 = inlined_call_operand.vmem [shape: bf16[256,16], index: 0, kind: input, shape index: {}]
  %s1 = inlined_call_operand.vmem [shape: bf16[16,64], index: 1, kind: input, shape index: {}]
  %s2 = inlined_call_operand.vmem [shape: f32[1,64], index: 2, kind: input, shape index: {}]
  %s3 = inlined_call_operand.vmem [shape: bf16[64,128], index: 3, kind: input, shape index: {}]
  %s4 = inlined_call_operand.vmem [shape: f32[1,128], index: 4, kind: input, shape index: {}]
  %s5 = inlined_call_operand.vmem [shape: bf16[128,64], index: 5, kind: input, shape index: {}]
  %s6 = inlined_call_operand.vmem [shape: f32[1,64], index: 6, kind: input, shape index: {}]
  %s7 = inlined_call_operand.vmem [shape: bf16[64,3], index: 7, kind: input, shape index: {}]
  %s8 = inlined_call_operand.vmem [shape: f32[1,3], index: 8, kind: input, shape index: {}]
  %s9 = inlined_call_operand.vmem [shape: f32[256,3], index: 9, kind: output, shape index: {}]
  %s10 = sld [smem:[#allocation0]]
  $region69: #{tpu_custom_call.1} parent=0
    _
  %s12 = ssub.s32 1, %s10
  %s13 = scalar_select 0, %s12, %s10
  loop: start=0, step=1, limit=4
  $region2: #{tpu_custom_call.1} parent=0 // loop_pre_header
    _
  $region3: #{tpu_custom_call.1} parent=0 // loop_header
    %s15 = sphi 0, %s19
    %p16 = scmp.ge.s32.totalorder %s15, 4
    %s25 = sphi 0, %s27
    %s28 = sphi 0, %s25
    %s29 = sphi 0, %s28
    %s45 = sphi 0, %s29
    %s49 = sphi 0, %s49
    %s51 = sphi 0, %s49
    %s52 = sphi 0, %s51
    %s66 = sphi 0, %s52
    %s70 = sphi 0, %s70
    %s72 = sphi 0, %s70
    %s73 = sphi 0, %s72
    %s87 = sphi 0, %s73
    %s91 = sphi 0, %s91
    %s93 = sphi 0, %s91
    %s94 = sphi 0, %s93
    %s108 = sphi 0, %s94
    %s112 = sphi 0, %s112
    %s114 = sphi 0, %s112
    %s115 = sphi 0, %s114
    %s129 = sphi 0, %s115
    %s133 = sphi 0, %s133
    %s135 = sphi 0, %s133
    %s136 = sphi 0, %s135
    %s150 = sphi 0, %s136
    %s154 = sphi 0, %s154
    %s156 = sphi 0, %s154
    %s157 = sphi 0, %s156
    %s171 = sphi 0, %s157
    %s175 = sphi 0, %s175
    %s177 = sphi 0, %s175
    %s178 = sphi 0, %s177
    %s192 = sphi 0, %s178
    %s196 = sphi 0, %s196
    %s198 = sphi 0, %s196
    %s199 = sphi 0, %s198
    %s213 = sphi 0, %s199
    %s219 = sphi 0, %s221
    %s222 = sphi 0, %s219
    %s223 = sphi 0, %s222
    %s239 = sphi 0, %s223
  $region4: #{tpu_custom_call.1} parent=0 // loop_header_branch
    %18 = sbr.rel (%p16) target = $region8
  $region5: #{tpu_custom_call.1} parent=0 // loop_body
    %s20 = ssub.s32 %s15, 1
    %s21 = ssub.s32 %s15, 2
    %s22 = sadd.s32 %s15, 1
    %s23 = ssub.s32 %s15, %s22
    %p24 = scmp.eq.s32.totalorder %s23, 0
    %s26 = sadd.s32 %s25, 1
    %s27 = scalar_select %p24, %s25, %s26
    %p30 = pneg %p24
    %p31 = scmp.eq.s32.totalorder %s15, 1
    %p32 = por %p30, %p31
    %p33 = scmp.ne.s32.totalorder %s25, %s28
    %p34 = scmp.eq.s32.totalorder %s15, 0
    %p35 = por %p33, %p34
    %p36 = scmp.ne.s32.totalorder %s25, %s28
    %p37 = scmp.eq.s32.totalorder %s20, 1
    %p38 = por %p36, %p37
    %p39 = scmp.ne.s32.totalorder %s28, %s29
    %p40 = scmp.eq.s32.totalorder %s20, 0
    %p41 = por %p39, %p40
    %p42 = scmp.ne.s32.totalorder %s28, %s29
    %p43 = scmp.eq.s32.totalorder %s21, 1
    %p44 = por %p42, %p43
    %p46 = scmp.ne.s32.totalorder %s29, %s45
    %p47 = scmp.eq.s32.totalorder %s21, 0
    %p48 = por %p46, %p47
    %s50 = sadd.s32 %s49, 1
    %p53 = scmp.eq.s32.totalorder %s15, 1
    %p54 = scmp.ne.s32.totalorder %s49, %s51
    %p55 = scmp.eq.s32.totalorder %s15, 0
    %p56 = por %p54, %p55
    %p57 = scmp.ne.s32.totalorder %s49, %s51
    %p58 = scmp.eq.s32.totalorder %s20, 1
    %p59 = por %p57, %p58
    %p60 = scmp.ne.s32.totalorder %s51, %s52
    %p61 = scmp.eq.s32.totalorder %s20, 0
    %p62 = por %p60, %p61
    %p63 = scmp.ne.s32.totalorder %s51, %s52
    %p64 = scmp.eq.s32.totalorder %s21, 1
    %p65 = por %p63, %p64
    %p67 = scmp.ne.s32.totalorder %s52, %s66
    %p68 = scmp.eq.s32.totalorder %s21, 0
    %p69 = por %p67, %p68
    %s71 = sadd.s32 %s70, 1
    %p74 = scmp.eq.s32.totalorder %s15, 1
    %p75 = scmp.ne.s32.totalorder %s70, %s72
    %p76 = scmp.eq.s32.totalorder %s15, 0
    %p77 = por %p75, %p76
    %p78 = scmp.ne.s32.totalorder %s70, %s72
    %p79 = scmp.eq.s32.totalorder %s20, 1
    %p80 = por %p78, %p79
    %p81 = scmp.ne.s32.totalorder %s72, %s73
    %p82 = scmp.eq.s32.totalorder %s20, 0
    %p83 = por %p81, %p82
    %p84 = scmp.ne.s32.totalorder %s72, %s73
    %p85 = scmp.eq.s32.totalorder %s21, 1
    %p86 = por %p84, %p85
    %p88 = scmp.ne.s32.totalorder %s73, %s87
    %p89 = scmp.eq.s32.totalorder %s21, 0
    %p90 = por %p88, %p89
    %s92 = sadd.s32 %s91, 1
    %p95 = scmp.eq.s32.totalorder %s15, 1
    %p96 = scmp.ne.s32.totalorder %s91, %s93
    %p97 = scmp.eq.s32.totalorder %s15, 0
    %p98 = por %p96, %p97
    %p99 = scmp.ne.s32.totalorder %s91, %s93
    %p100 = scmp.eq.s32.totalorder %s20, 1
    %p101 = por %p99, %p100
    %p102 = scmp.ne.s32.totalorder %s93, %s94
    %p103 = scmp.eq.s32.totalorder %s20, 0
    %p104 = por %p102, %p103
    %p105 = scmp.ne.s32.totalorder %s93, %s94
    %p106 = scmp.eq.s32.totalorder %s21, 1
    %p107 = por %p105, %p106
    %p109 = scmp.ne.s32.totalorder %s94, %s108
    %p110 = scmp.eq.s32.totalorder %s21, 0
    %p111 = por %p109, %p110
    %s113 = sadd.s32 %s112, 1
    %p116 = scmp.eq.s32.totalorder %s15, 1
    %p117 = scmp.ne.s32.totalorder %s112, %s114
    %p118 = scmp.eq.s32.totalorder %s15, 0
    %p119 = por %p117, %p118
    %p120 = scmp.ne.s32.totalorder %s112, %s114
    %p121 = scmp.eq.s32.totalorder %s20, 1
    %p122 = por %p120, %p121
    %p123 = scmp.ne.s32.totalorder %s114, %s115
    %p124 = scmp.eq.s32.totalorder %s20, 0
    %p125 = por %p123, %p124
    %p126 = scmp.ne.s32.totalorder %s114, %s115
    %p127 = scmp.eq.s32.totalorder %s21, 1
    %p128 = por %p126, %p127
    %p130 = scmp.ne.s32.totalorder %s115, %s129
    %p131 = scmp.eq.s32.totalorder %s21, 0
    %p132 = por %p130, %p131
    %s134 = sadd.s32 %s133, 1
    %p137 = scmp.eq.s32.totalorder %s15, 1
    %p138 = scmp.ne.s32.totalorder %s133, %s135
    %p139 = scmp.eq.s32.totalorder %s15, 0
    %p140 = por %p138, %p139
    %p141 = scmp.ne.s32.totalorder %s133, %s135
    %p142 = scmp.eq.s32.totalorder %s20, 1
    %p143 = por %p141, %p142
    %p144 = scmp.ne.s32.totalorder %s135, %s136
    %p145 = scmp.eq.s32.totalorder %s20, 0
    %p146 = por %p144, %p145
    %p147 = scmp.ne.s32.totalorder %s135, %s136
    %p148 = scmp.eq.s32.totalorder %s21, 1
    %p149 = por %p147, %p148
    %p151 = scmp.ne.s32.totalorder %s136, %s150
    %p152 = scmp.eq.s32.totalorder %s21, 0
    %p153 = por %p151, %p152
    %s155 = sadd.s32 %s154, 1
    %p158 = scmp.eq.s32.totalorder %s15, 1
    %p159 = scmp.ne.s32.totalorder %s154, %s156
    %p160 = scmp.eq.s32.totalorder %s15, 0
    %p161 = por %p159, %p160
    %p162 = scmp.ne.s32.totalorder %s154, %s156
    %p163 = scmp.eq.s32.totalorder %s20, 1
    %p164 = por %p162, %p163
    %p165 = scmp.ne.s32.totalorder %s156, %s157
    %p166 = scmp.eq.s32.totalorder %s20, 0
    %p167 = por %p165, %p166
    %p168 = scmp.ne.s32.totalorder %s156, %s157
    %p169 = scmp.eq.s32.totalorder %s21, 1
    %p170 = por %p168, %p169
    %p172 = scmp.ne.s32.totalorder %s157, %s171
    %p173 = scmp.eq.s32.totalorder %s21, 0
    %p174 = por %p172, %p173
    %s176 = sadd.s32 %s175, 1
    %p179 = scmp.eq.s32.totalorder %s15, 1
    %p180 = scmp.ne.s32.totalorder %s175, %s177
    %p181 = scmp.eq.s32.totalorder %s15, 0
    %p182 = por %p180, %p181
    %p183 = scmp.ne.s32.totalorder %s175, %s177
    %p184 = scmp.eq.s32.totalorder %s20, 1
    %p185 = por %p183, %p184
    %p186 = scmp.ne.s32.totalorder %s177, %s178
    %p187 = scmp.eq.s32.totalorder %s20, 0
    %p188 = por %p186, %p187
    %p189 = scmp.ne.s32.totalorder %s177, %s178
    %p190 = scmp.eq.s32.totalorder %s21, 1
    %p191 = por %p189, %p190
    %p193 = scmp.ne.s32.totalorder %s178, %s192
    %p194 = scmp.eq.s32.totalorder %s21, 0
    %p195 = por %p193, %p194
    %s197 = sadd.s32 %s196, 1
    %p200 = scmp.eq.s32.totalorder %s15, 1
    %p201 = scmp.ne.s32.totalorder %s196, %s198
    %p202 = scmp.eq.s32.totalorder %s15, 0
    %p203 = por %p201, %p202
    %p204 = scmp.ne.s32.totalorder %s196, %s198
    %p205 = scmp.eq.s32.totalorder %s20, 1
    %p206 = por %p204, %p205
    %p207 = scmp.ne.s32.totalorder %s198, %s199
    %p208 = scmp.eq.s32.totalorder %s20, 0
    %p209 = por %p207, %p208
    %p210 = scmp.ne.s32.totalorder %s198, %s199
    %p211 = scmp.eq.s32.totalorder %s21, 1
    %p212 = por %p210, %p211
    %p214 = scmp.ne.s32.totalorder %s199, %s213
    %p215 = scmp.eq.s32.totalorder %s21, 0
    %p216 = por %p214, %p215
    %s217 = ssub.s32 %s15, %s22
    %p218 = scmp.eq.s32.totalorder %s217, 0
    %s220 = sadd.s32 %s219, 1
    %s221 = scalar_select %p218, %s219, %s220
    %p224 = pneg %p218
    %p225 = scmp.eq.s32.totalorder %s15, 1
    %p226 = por %p224, %p225
    %p227 = scmp.ne.s32.totalorder %s219, %s222
    %p228 = scmp.eq.s32.totalorder %s15, 0
    %p229 = por %p227, %p228
    %p230 = scmp.ne.s32.totalorder %s219, %s222
    %p231 = scmp.eq.s32.totalorder %s20, 1
    %p232 = por %p230, %p231
    %p233 = scmp.ne.s32.totalorder %s222, %s223
    %p234 = scmp.eq.s32.totalorder %s20, 0
    %p235 = por %p233, %p234
    %p236 = scmp.ne.s32.totalorder %s222, %s223
    %p237 = scmp.eq.s32.totalorder %s21, 1
    %p238 = por %p236, %p237
    %p240 = scmp.ne.s32.totalorder %s223, %s239
    %p241 = scmp.eq.s32.totalorder %s21, 0
    %p242 = por %p240, %p241
    %p243 = scmp.le.s32.totalorder 1, %s15
    %p244 = scmp.lt.s32.totalorder %s15, 3
    %p245 = pnand %p243, %p244
    %p246 = pneg %p245
    // Predicated region
    $region9: #{tpu_custom_call.1} parent=5 // pred_check
      _
    $region10: #{tpu_custom_call.1} parent=5 // pred_check_branch
      %248 = sbr.rel (%p245) target = $region12
    $region11: #{tpu_custom_call.1} parent=5 // pred_region
      %s249 = ssub.s32 %s15, 1
      // Predicated region
      $region13: #{tpu_custom_call.1} parent=11 // pred_check
        %p250 = pneg %p62
      $region14: #{tpu_custom_call.1} parent=11 // pred_check_branch
        %252 = sbr.rel (%p250) target = $region16
      $region15: #{tpu_custom_call.1} parent=11 // pred_region
        _
      $region16: #{tpu_custom_call.1} parent=11 // pred_fallthru
        _
      // Predicated region
      $region17: #{tpu_custom_call.1} parent=11 // pred_check
        %p253 = pneg %p83
      $region18: #{tpu_custom_call.1} parent=11 // pred_check_branch
        %255 = sbr.rel (%p253) target = $region20
      $region19: #{tpu_custom_call.1} parent=11 // pred_region
        _
      $region20: #{tpu_custom_call.1} parent=11 // pred_fallthru
        _
      // Predicated region
      $region21: #{tpu_custom_call.1} parent=11 // pred_check
        %p256 = pneg %p104
      $region22: #{tpu_custom_call.1} parent=11 // pred_check_branch
        %258 = sbr.rel (%p256) target = $region24
      $region23: #{tpu_custom_call.1} parent=11 // pred_region
        _
      $region24: #{tpu_custom_call.1} parent=11 // pred_fallthru
        _
      // Predicated region
      $region25: #{tpu_custom_call.1} parent=11 // pred_check
        %p259 = pneg %p125
      $region26: #{tpu_custom_call.1} parent=11 // pred_check_branch
        %261 = sbr.rel (%p259) target = $region28
      $region27: #{tpu_custom_call.1} parent=11 // pred_region
        _
      $region28: #{tpu_custom_call.1} parent=11 // pred_fallthru
        _
      // Predicated region
      $region29: #{tpu_custom_call.1} parent=11 // pred_check
        %p262 = pneg %p146
      $region30: #{tpu_custom_call.1} parent=11 // pred_check_branch
        %264 = sbr.rel (%p262) target = $region32
      $region31: #{tpu_custom_call.1} parent=11 // pred_region
        _
      $region32: #{tpu_custom_call.1} parent=11 // pred_fallthru
        _
      // Predicated region
      $region33: #{tpu_custom_call.1} parent=11 // pred_check
        %p265 = pneg %p167
      $region34: #{tpu_custom_call.1} parent=11 // pred_check_branch
        %267 = sbr.rel (%p265) target = $region36
      $region35: #{tpu_custom_call.1} parent=11 // pred_region
        _
      $region36: #{tpu_custom_call.1} parent=11 // pred_fallthru
        _
      // Predicated region
      $region37: #{tpu_custom_call.1} parent=11 // pred_check
        %p268 = pneg %p188
      $region38: #{tpu_custom_call.1} parent=11 // pred_check_branch
        %270 = sbr.rel (%p268) target = $region40
      $region39: #{tpu_custom_call.1} parent=11 // pred_region
        _
      $region40: #{tpu_custom_call.1} parent=11 // pred_fallthru
        _
      // Predicated region
      $region41: #{tpu_custom_call.1} parent=11 // pred_check
        %p271 = pneg %p209
      $region42: #{tpu_custom_call.1} parent=11 // pred_check_branch
        %273 = sbr.rel (%p271) target = $region44
      $region43: #{tpu_custom_call.1} parent=11 // pred_region
        _
      $region44: #{tpu_custom_call.1} parent=11 // pred_fallthru
        _
    $region12: #{tpu_custom_call.1} parent=5 // pred_fallthru
      _
    %p274 = scmp.lt.s32.totalorder %s15, 2
    // Predicated region
    $region45: #{tpu_custom_call.1} parent=5 // pred_check
      %p275 = pneg %p274
    $region46: #{tpu_custom_call.1} parent=5 // pred_check_branch
      %277 = sbr.rel (%p275) target = $region48
    $region47: #{tpu_custom_call.1} parent=5 // pred_region
      // Predicated region
      $region49: #{tpu_custom_call.1} parent=47 // pred_check
        %p278 = pneg %p35
      $region50: #{tpu_custom_call.1} parent=47 // pred_check_branch
        %280 = sbr.rel (%p278) target = $region52
      $region51: #{tpu_custom_call.1} parent=47 // pred_region
        %s281 = smul.u32 16, %s15
        %p282 = scmp.lt.s32.totalorder %s281, 31
        %s283 = scalar_select %p282, %s281, 31
        %s284 = smul.addr %s283, 4
        %s285 = scalar_lea.vmem %s0, %s284
        %s286 = smul.u32 16, %s15
      $region52: #{tpu_custom_call.1} parent=47 // pred_fallthru
        _
    $region48: #{tpu_custom_call.1} parent=5 // pred_fallthru
      _
    %p287 = scmp.le.s32.totalorder 1, %s15
    %p288 = scmp.lt.s32.totalorder %s15, 3
    %p289 = pnand %p287, %p288
    %p290 = pneg %p289
    // Predicated region
    $region53: #{tpu_custom_call.1} parent=5 // pred_check
      _
    $region54: #{tpu_custom_call.1} parent=5 // pred_check_branch
      %292 = sbr.rel (%p289) target = $region56
    $region55: #{tpu_custom_call.1} parent=5 // pred_region
      %s293 = ssub.s32 %s15, 1
      %s294 = smul.u32 16, %s20
      %p295 = scmp.lt.s32.totalorder %s294, 31
      %s296 = scalar_select %p295, %s294, 31
      %s297 = smul.addr %s296, 4
      %s298 = scalar_lea.vmem %s0, %s297
      %p299 = pneg %p41
      %p300 = pneg %p38
      %p301 = pneg %p62
      %p302 = pneg %p59
      %p303 = pneg %p83
      %p304 = pneg %p80
      %p305 = pneg %p104
      %p306 = pneg %p101
      %p307 = pneg %p125
      %p308 = pneg %p122
      %p309 = pneg %p146
      %p310 = pneg %p143
      %p311 = pneg %p167
      %p312 = pneg %p164
      %p313 = pneg %p188
      %p314 = pneg %p185
      %p315 = pneg %p209
      %p316 = pneg %p206
      %p317 = pneg %p235
      %p318 = pneg %p232
      %s319 = smul.u32 16, %s20
      %p320 = scmp.lt.s32.totalorder %s319, 31
      %s321 = scalar_select %p320, %s319, 31
      %s322 = smul.addr %s321, 8
      %s323 = scalar_lea.vmem %s9, %s322
      %s324 = smul.u32 16, %s20
      %p325 = scmp.lt.s32.totalorder %s324, 31
      %s326 = scalar_select %p325, %s324, 31
      %s327 = smul.addr %s326, 4
      %s328 = scalar_lea.vmem %s0, %s327
      %s329 = smul.u32 16, %s20
      %s330 = smul.u32 16, %s20
      %p331 = scmp.lt.s32.totalorder %s330, 31
      %s332 = scalar_select %p331, %s330, 31
      %s333 = smul.addr %s332, 8
      %s334 = scalar_lea.vmem %s9, %s333
      %s335 = smul.u32 16, %s20
      %v337 = vld [vmem:[%s328] sm:$0xf]
      %v338 = vld [vmem:[%s328 + $0x4] sm:$0xf]
      %v339 = vld [vmem:[%s328 + $0x8] sm:$0xf]
      %v340 = vld [vmem:[%s328 + $0xc] sm:$0xf]
      %v341 = vld [vmem:[%s328 + $0x10] sm:$0xf]
      %v342 = vld [vmem:[%s328 + $0x14] sm:$0xf]
      %v343 = vld [vmem:[%s328 + $0x18] sm:$0xf]
      %v344 = vld [vmem:[%s328 + $0x1c] sm:$0xf]
      %v345 = vld [vmem:[%s328 + $0x20] sm:$0xf]
      %v346 = vld [vmem:[%s328 + $0x24] sm:$0xf]
      %v347 = vld [vmem:[%s328 + $0x28] sm:$0xf]
      %v348 = vld [vmem:[%s328 + $0x2c] sm:$0xf]
      %v349 = vld [vmem:[%s328 + $0x30] sm:$0xf]
      %v350 = vld [vmem:[%s328 + $0x34] sm:$0xf]
      %v351 = vld [vmem:[%s328 + $0x38] sm:$0xf]
      %v352 = vld [vmem:[%s328 + $0x3c] sm:$0xf]
      %v353 = vld [vmem:[%s1] sm:$0xf]
      %v354 = vld [vmem:[%s1 + $0x4] sm:$0xf]
      %v355 = vld [vmem:[%s2] sm:$0x1]
      %v357 = vperm.slane %v355, 0
      %v375 = vunpack.c.l.b16 %v337
      %v376 = vunpack.c.l.b16 %v338
      %v377 = vunpack.c.l.b16 %v339
      %v378 = vunpack.c.l.b16 %v340
      %v379 = vunpack.c.l.b16 %v341
      %v380 = vunpack.c.l.b16 %v342
      %v381 = vunpack.c.l.b16 %v343
      %v382 = vunpack.c.l.b16 %v344
      %v383 = vunpack.c.l.b16 %v345
      %v384 = vunpack.c.l.b16 %v346
      %v385 = vunpack.c.l.b16 %v347
      %v386 = vunpack.c.l.b16 %v348
      %v387 = vunpack.c.l.b16 %v349
      %v388 = vunpack.c.l.b16 %v350
      %v389 = vunpack.c.l.b16 %v351
      %v390 = vunpack.c.l.b16 %v352
      %v391 = vpack.c.b16 %v376, %v375
      %v392 = vpack.c.b16 %v378, %v377
      %v393 = vpack.c.b16 %v380, %v379
      %v394 = vpack.c.b16 %v382, %v381
      %v395 = vpack.c.b16 %v384, %v383
      %v396 = vpack.c.b16 %v386, %v385
      %v397 = vpack.c.b16 %v388, %v387
      %v398 = vpack.c.b16 %v390, %v389
      %v401 = vunpack.c.l.b16 %v353
      %v402 = vunpack.c.l.b16 %v354
      %v403 = vpack.c.b16 %v402, %v401
      %vm405 = vcmask 130048
      %v407 = vsel %vm405, %v391, 0
      %v410 = vsel %vm405, %v392, 0
      %v413 = vsel %vm405, %v393, 0
      %v416 = vsel %vm405, %v394, 0
      %v419 = vsel %vm405, %v395, 0
      %v422 = vsel %vm405, %v396, 0
      %v425 = vsel %vm405, %v397, 0
      %v428 = vsel %vm405, %v398, 0
      %430 = vmatpush.bf16.msra.mxu0 0
      %431 = vmatpush.bf16.msra.mxu0 0
      %432 = vmatpush.bf16.msra.mxu0 0
      %433 = vmatpush.bf16.msra.mxu0 0
      %434 = vmatpush.bf16.msra.mxu0 0
      %435 = vmatpush.bf16.msra.mxu0 0
      %436 = vmatpush.bf16.msra.mxu0 0
      %437 = vmatpush.bf16.msra.mxu0 %v403
      %438 = vmatmul.bf16.gmra.mxu0 %v407
      %v439 = vpop.f32.mrf.mxu0
      %v440 = vadd.f32 %v357, %v439
      %v441 = vpop.f32.mrf.mxu0
      %v442 = vadd.f32 %v357, %v441
      %443 = vmatmul.bf16.gmra.mxu0 %v410
      %v444 = vpop.f32.mrf.mxu0
      %v445 = vadd.f32 %v357, %v444
      %v446 = vpop.f32.mrf.mxu0
      %v447 = vadd.f32 %v357, %v446
      %448 = vmatmul.bf16.gmra.mxu0 %v413
      %v449 = vpop.f32.mrf.mxu0
      %v450 = vadd.f32 %v357, %v449
      %v451 = vpop.f32.mrf.mxu0
      %v452 = vadd.f32 %v357, %v451
      %453 = vmatmul.bf16.gmra.mxu0 %v416
      %v454 = vpop.f32.mrf.mxu0
      %v455 = vadd.f32 %v357, %v454
      %v456 = vpop.f32.mrf.mxu0
      %v457 = vadd.f32 %v357, %v456
      %458 = vmatmul.bf16.gmra.mxu0 %v419
      %v459 = vpop.f32.mrf.mxu0
      %v460 = vadd.f32 %v357, %v459
      %v461 = vpop.f32.mrf.mxu0
      %v462 = vadd.f32 %v357, %v461
      %463 = vmatmul.bf16.gmra.mxu0 %v422
      %v464 = vpop.f32.mrf.mxu0
      %v465 = vadd.f32 %v357, %v464
      %v466 = vpop.f32.mrf.mxu0
      %v467 = vadd.f32 %v357, %v466
      %468 = vmatmul.bf16.gmra.mxu0 %v425
      %v469 = vpop.f32.mrf.mxu0
      %v470 = vadd.f32 %v357, %v469
      %v471 = vpop.f32.mrf.mxu0
      %v472 = vadd.f32 %v357, %v471
      %473 = vmatmul.bf16.gmra.mxu0 %v428
      %v474 = vpop.f32.mrf.mxu0
      %v475 = vadd.f32 %v357, %v474
      %v476 = vpop.f32.mrf.mxu0
      %v477 = vadd.f32 %v357, %v476
      %478 = vdwg.mxu0
      %v479 = vmax.f32 %v440, 0.0
      %v480 = vmax.f32 %v442, 0.0
      %v481 = vmax.f32 %v445, 0.0
      %v482 = vmax.f32 %v447, 0.0
      %v483 = vmax.f32 %v450, 0.0
      %v484 = vmax.f32 %v452, 0.0
      %v485 = vmax.f32 %v455, 0.0
      %v486 = vmax.f32 %v457, 0.0
      %v487 = vmax.f32 %v460, 0.0
      %v488 = vmax.f32 %v462, 0.0
      %v489 = vmax.f32 %v465, 0.0
      %v490 = vmax.f32 %v467, 0.0
      %v491 = vmax.f32 %v470, 0.0
      %v492 = vmax.f32 %v472, 0.0
      %v493 = vmax.f32 %v475, 0.0
      %v494 = vmax.f32 %v477, 0.0
      %v495 = vpack.c.bf16 %v480, %v479
      %v496 = vpack.c.bf16 %v482, %v481
      %v497 = vpack.c.bf16 %v484, %v483
      %v498 = vpack.c.bf16 %v486, %v485
      %v499 = vpack.c.bf16 %v488, %v487
      %v500 = vpack.c.bf16 %v490, %v489
      %v501 = vpack.c.bf16 %v492, %v491
      %v502 = vpack.c.bf16 %v494, %v493
      %v503 = vld [vmem:[%s3] sm:$0xf]
      %v504 = vld [vmem:[%s3 + $0x4] sm:$0xf]
      %v505 = vld [vmem:[%s3 + $0x8] sm:$0xf]
      %v506 = vld [vmem:[%s3 + $0xc] sm:$0xf]
      %v507 = vld [vmem:[%s3 + $0x10] sm:$0xf]
      %v508 = vld [vmem:[%s3 + $0x14] sm:$0xf]
      %v509 = vld [vmem:[%s3 + $0x18] sm:$0xf]
      %v510 = vld [vmem:[%s3 + $0x1c] sm:$0xf]
      %v511 = vld [vmem:[%s4] sm:$0x1]
      %v513 = vperm.slane %v511, 0
      %v523 = vunpack.c.l.b16 %v503
      %v524 = vunpack.c.l.b16 %v504
      %v525 = vunpack.c.l.b16 %v505
      %v526 = vunpack.c.l.b16 %v506
      %v527 = vunpack.c.l.b16 %v507
      %v528 = vunpack.c.l.b16 %v508
      %v529 = vunpack.c.l.b16 %v509
      %v530 = vunpack.c.l.b16 %v510
      %v531 = vpack.c.b16 %v524, %v523
      %v532 = vpack.c.b16 %v526, %v525
      %v533 = vpack.c.b16 %v528, %v527
      %v534 = vpack.c.b16 %v530, %v529
      %vm539 = vcmask 523264
      %v541 = vsel %vm539, %v495, 0
      %v544 = vsel %vm539, %v496, 0
      %v547 = vsel %vm539, %v497, 0
      %v550 = vsel %vm539, %v498, 0
      %v553 = vsel %vm539, %v499, 0
      %v556 = vsel %vm539, %v500, 0
      %v559 = vsel %vm539, %v501, 0
      %v562 = vsel %vm539, %v502, 0
      %564 = vmatpush.bf16.msra.mxu0 0
      %565 = vmatpush.bf16.msra.mxu0 0
      %566 = vmatpush.bf16.msra.mxu0 0
      %567 = vmatpush.bf16.msra.mxu0 0
      %568 = vmatpush.bf16.msra.mxu0 %v534
      %569 = vmatpush.bf16.msra.mxu0 %v533
      %570 = vmatpush.bf16.msra.mxu0 %v532
      %571 = vmatpush.bf16.msra.mxu0 %v531
      %572 = vmatmul.bf16.gmra.mxu0 %v541
      %v573 = vpop.f32.mrf.mxu0
      %v574 = vadd.f32 %v513, %v573
      %v575 = vpop.f32.mrf.mxu0
      %v576 = vadd.f32 %v513, %v575
      %577 = vmatmul.bf16.gmra.mxu0 %v544
      %v578 = vpop.f32.mrf.mxu0
      %v579 = vadd.f32 %v513, %v578
      %v580 = vpop.f32.mrf.mxu0
      %v581 = vadd.f32 %v513, %v580
      %582 = vmatmul.bf16.gmra.mxu0 %v547
      %v583 = vpop.f32.mrf.mxu0
      %v584 = vadd.f32 %v513, %v583
      %v585 = vpop.f32.mrf.mxu0
      %v586 = vadd.f32 %v513, %v585
      %587 = vmatmul.bf16.gmra.mxu0 %v550
      %v588 = vpop.f32.mrf.mxu0
      %v589 = vadd.f32 %v513, %v588
      %v590 = vpop.f32.mrf.mxu0
      %v591 = vadd.f32 %v513, %v590
      %592 = vmatmul.bf16.gmra.mxu0 %v553
      %v593 = vpop.f32.mrf.mxu0
      %v594 = vadd.f32 %v513, %v593
      %v595 = vpop.f32.mrf.mxu0
      %v596 = vadd.f32 %v513, %v595
      %597 = vmatmul.bf16.gmra.mxu0 %v556
      %v598 = vpop.f32.mrf.mxu0
      %v599 = vadd.f32 %v513, %v598
      %v600 = vpop.f32.mrf.mxu0
      %v601 = vadd.f32 %v513, %v600
      %602 = vmatmul.bf16.gmra.mxu0 %v559
      %v603 = vpop.f32.mrf.mxu0
      %v604 = vadd.f32 %v513, %v603
      %v605 = vpop.f32.mrf.mxu0
      %v606 = vadd.f32 %v513, %v605
      %607 = vmatmul.bf16.gmra.mxu0 %v562
      %v608 = vpop.f32.mrf.mxu0
      %v609 = vadd.f32 %v513, %v608
      %v610 = vpop.f32.mrf.mxu0
      %v611 = vadd.f32 %v513, %v610
      %612 = vdwg.mxu0
      %v613 = vmax.f32 %v574, 0.0
      %v614 = vmax.f32 %v576, 0.0
      %v615 = vmax.f32 %v579, 0.0
      %v616 = vmax.f32 %v581, 0.0
      %v617 = vmax.f32 %v584, 0.0
      %v618 = vmax.f32 %v586, 0.0
      %v619 = vmax.f32 %v589, 0.0
      %v620 = vmax.f32 %v591, 0.0
      %v621 = vmax.f32 %v594, 0.0
      %v622 = vmax.f32 %v596, 0.0
      %v623 = vmax.f32 %v599, 0.0
      %v624 = vmax.f32 %v601, 0.0
      %v625 = vmax.f32 %v604, 0.0
      %v626 = vmax.f32 %v606, 0.0
      %v627 = vmax.f32 %v609, 0.0
      %v628 = vmax.f32 %v611, 0.0
      %v629 = vpack.c.bf16 %v614, %v613
      %v630 = vpack.c.bf16 %v616, %v615
      %v631 = vpack.c.bf16 %v618, %v617
      %v632 = vpack.c.bf16 %v620, %v619
      %v633 = vpack.c.bf16 %v622, %v621
      %v634 = vpack.c.bf16 %v624, %v623
      %v635 = vpack.c.bf16 %v626, %v625
      %v636 = vpack.c.bf16 %v628, %v627
      %v637 = vld [vmem:[%s5] sm:$0xf]
      %v638 = vld [vmem:[%s5 + $0x4] sm:$0xf]
      %v639 = vld [vmem:[%s5 + $0x8] sm:$0xf]
      %v640 = vld [vmem:[%s5 + $0xc] sm:$0xf]
      %v641 = vld [vmem:[%s5 + $0x10] sm:$0xf]
      %v642 = vld [vmem:[%s5 + $0x14] sm:$0xf]
      %v643 = vld [vmem:[%s5 + $0x18] sm:$0xf]
      %v644 = vld [vmem:[%s5 + $0x1c] sm:$0xf]
      %v645 = vld [vmem:[%s5 + $0x20] sm:$0xf]
      %v646 = vld [vmem:[%s5 + $0x24] sm:$0xf]
      %v647 = vld [vmem:[%s5 + $0x28] sm:$0xf]
      %v648 = vld [vmem:[%s5 + $0x2c] sm:$0xf]
      %v649 = vld [vmem:[%s5 + $0x30] sm:$0xf]
      %v650 = vld [vmem:[%s5 + $0x34] sm:$0xf]
      %v651 = vld [vmem:[%s5 + $0x38] sm:$0xf]
      %v652 = vld [vmem:[%s5 + $0x3c] sm:$0xf]
      %v653 = vld [vmem:[%s6] sm:$0x1]
      %v655 = vperm.slane %v653, 0
      %v673 = vunpack.c.l.b16 %v637
      %v674 = vunpack.c.l.b16 %v638
      %v675 = vunpack.c.l.b16 %v639
      %v676 = vunpack.c.l.b16 %v640
      %v677 = vunpack.c.l.b16 %v641
      %v678 = vunpack.c.l.b16 %v642
      %v679 = vunpack.c.l.b16 %v643
      %v680 = vunpack.c.l.b16 %v644
      %v681 = vunpack.c.l.b16 %v645
      %v682 = vunpack.c.l.b16 %v646
      %v683 = vunpack.c.l.b16 %v647
      %v684 = vunpack.c.l.b16 %v648
      %v685 = vunpack.c.l.b16 %v649
      %v686 = vunpack.c.l.b16 %v650
      %v687 = vunpack.c.l.b16 %v651
      %v688 = vunpack.c.l.b16 %v652
      %v689 = vpack.c.b16 %v674, %v673
      %v690 = vpack.c.b16 %v676, %v675
      %v691 = vpack.c.b16 %v678, %v677
      %v692 = vpack.c.b16 %v680, %v679
      %v693 = vpack.c.b16 %v682, %v681
      %v694 = vpack.c.b16 %v684, %v683
      %v695 = vpack.c.b16 %v686, %v685
      %v696 = vpack.c.b16 %v688, %v687
      %705 = vmatpush.bf16.msra.mxu0 %v696
      %706 = vmatpush.bf16.msra.mxu0 %v695
      %707 = vmatpush.bf16.msra.mxu0 %v694
      %708 = vmatpush.bf16.msra.mxu0 %v693
      %709 = vmatpush.bf16.msra.mxu0 %v692
      %710 = vmatpush.bf16.msra.mxu0 %v691
      %711 = vmatpush.bf16.msra.mxu0 %v690
      %712 = vmatpush.bf16.msra.mxu0 %v689
      %713 = vmatmul.bf16.gmra.mxu0 %v629
      %v714 = vpop.f32.mrf.mxu0
      %v715 = vadd.f32 %v655, %v714
      %v716 = vpop.f32.mrf.mxu0
      %v717 = vadd.f32 %v655, %v716
      %718 = vmatmul.bf16.gmra.mxu0 %v630
      %v719 = vpop.f32.mrf.mxu0
      %v720 = vadd.f32 %v655, %v719
      %v721 = vpop.f32.mrf.mxu0
      %v722 = vadd.f32 %v655, %v721
      %723 = vmatmul.bf16.gmra.mxu0 %v631
      %v724 = vpop.f32.mrf.mxu0
      %v725 = vadd.f32 %v655, %v724
      %v726 = vpop.f32.mrf.mxu0
      %v727 = vadd.f32 %v655, %v726
      %728 = vmatmul.bf16.gmra.mxu0 %v632
      %v729 = vpop.f32.mrf.mxu0
      %v730 = vadd.f32 %v655, %v729
      %v731 = vpop.f32.mrf.mxu0
      %v732 = vadd.f32 %v655, %v731
      %733 = vmatmul.bf16.gmra.mxu0 %v633
      %v734 = vpop.f32.mrf.mxu0
      %v735 = vadd.f32 %v655, %v734
      %v736 = vpop.f32.mrf.mxu0
      %v737 = vadd.f32 %v655, %v736
      %738 = vmatmul.bf16.gmra.mxu0 %v634
      %v739 = vpop.f32.mrf.mxu0
      %v740 = vadd.f32 %v655, %v739
      %v741 = vpop.f32.mrf.mxu0
      %v742 = vadd.f32 %v655, %v741
      %743 = vmatmul.bf16.gmra.mxu0 %v635
      %v744 = vpop.f32.mrf.mxu0
      %v745 = vadd.f32 %v655, %v744
      %v746 = vpop.f32.mrf.mxu0
      %v747 = vadd.f32 %v655, %v746
      %748 = vmatmul.bf16.gmra.mxu0 %v636
      %v749 = vpop.f32.mrf.mxu0
      %v750 = vadd.f32 %v655, %v749
      %v751 = vpop.f32.mrf.mxu0
      %v752 = vadd.f32 %v655, %v751
      %753 = vdwg.mxu0
      %v754 = vmax.f32 %v715, 0.0
      %v755 = vmax.f32 %v717, 0.0
      %v756 = vmax.f32 %v720, 0.0
      %v757 = vmax.f32 %v722, 0.0
      %v758 = vmax.f32 %v725, 0.0
      %v759 = vmax.f32 %v727, 0.0
      %v760 = vmax.f32 %v730, 0.0
      %v761 = vmax.f32 %v732, 0.0
      %v762 = vmax.f32 %v735, 0.0
      %v763 = vmax.f32 %v737, 0.0
      %v764 = vmax.f32 %v740, 0.0
      %v765 = vmax.f32 %v742, 0.0
      %v766 = vmax.f32 %v745, 0.0
      %v767 = vmax.f32 %v747, 0.0
      %v768 = vmax.f32 %v750, 0.0
      %v769 = vmax.f32 %v752, 0.0
      %v770 = vpack.c.bf16 %v755, %v754
      %v771 = vpack.c.bf16 %v757, %v756
      %v772 = vpack.c.bf16 %v759, %v758
      %v773 = vpack.c.bf16 %v761, %v760
      %v774 = vpack.c.bf16 %v763, %v762
      %v775 = vpack.c.bf16 %v765, %v764
      %v776 = vpack.c.bf16 %v767, %v766
      %v777 = vpack.c.bf16 %v769, %v768
      %v778 = vld [vmem:[%s7] sm:$0xf]
      %v779 = vld [vmem:[%s7 + $0x4] sm:$0xf]
      %v780 = vld [vmem:[%s7 + $0x8] sm:$0xf]
      %v781 = vld [vmem:[%s7 + $0xc] sm:$0xf]
      %v782 = vld [vmem:[%s7 + $0x10] sm:$0xf]
      %v783 = vld [vmem:[%s7 + $0x14] sm:$0xf]
      %v784 = vld [vmem:[%s7 + $0x18] sm:$0xf]
      %v785 = vld [vmem:[%s7 + $0x1c] sm:$0xf]
      %v786 = vld [vmem:[%s8] sm:$0x1]
      %v788 = vperm.slane %v786, 0
      %v798 = vunpack.c.l.b16 %v778
      %v799 = vunpack.c.l.b16 %v779
      %v800 = vunpack.c.l.b16 %v780
      %v801 = vunpack.c.l.b16 %v781
      %v802 = vunpack.c.l.b16 %v782
      %v803 = vunpack.c.l.b16 %v783
      %v804 = vunpack.c.l.b16 %v784
      %v805 = vunpack.c.l.b16 %v785
      %v806 = vpack.c.b16 %v799, %v798
      %v807 = vpack.c.b16 %v801, %v800
      %v808 = vpack.c.b16 %v803, %v802
      %v809 = vpack.c.b16 %v805, %v804
      %v815 = vsel %vm539, %v770, 0
      %v818 = vsel %vm539, %v771, 0
      %v821 = vsel %vm539, %v772, 0
      %v824 = vsel %vm539, %v773, 0
      %v827 = vsel %vm539, %v774, 0
      %v830 = vsel %vm539, %v775, 0
      %v833 = vsel %vm539, %v776, 0
      %v836 = vsel %vm539, %v777, 0
      %838 = vmatpush.bf16.msra.mxu0 0
      %839 = vmatpush.bf16.msra.mxu0 0
      %840 = vmatpush.bf16.msra.mxu0 0
      %841 = vmatpush.bf16.msra.mxu0 0
      %842 = vmatpush.bf16.msra.mxu0 %v809
      %843 = vmatpush.bf16.msra.mxu0 %v808
      %844 = vmatpush.bf16.msra.mxu0 %v807
      %845 = vmatpush.bf16.msra.mxu0 %v806
      %846 = vmatmul.bf16.gmra.mxu0 %v815
      %v847 = vpop.f32.mrf.mxu0
      %v848 = vadd.f32 %v788, %v847
      %v849 = vpop.f32.mrf.mxu0
      %v850 = vadd.f32 %v788, %v849
      %851 = vmatmul.bf16.gmra.mxu0 %v818
      %v852 = vpop.f32.mrf.mxu0
      %v853 = vadd.f32 %v788, %v852
      %v854 = vpop.f32.mrf.mxu0
      %v855 = vadd.f32 %v788, %v854
      %856 = vmatmul.bf16.gmra.mxu0 %v821
      %v857 = vpop.f32.mrf.mxu0
      %v858 = vadd.f32 %v788, %v857
      %v859 = vpop.f32.mrf.mxu0
      %v860 = vadd.f32 %v788, %v859
      %861 = vmatmul.bf16.gmra.mxu0 %v824
      %v862 = vpop.f32.mrf.mxu0
      %v863 = vadd.f32 %v788, %v862
      %v864 = vpop.f32.mrf.mxu0
      %v865 = vadd.f32 %v788, %v864
      %866 = vmatmul.bf16.gmra.mxu0 %v827
      %v867 = vpop.f32.mrf.mxu0
      %v868 = vadd.f32 %v788, %v867
      %v869 = vpop.f32.mrf.mxu0
      %v870 = vadd.f32 %v788, %v869
      %871 = vmatmul.bf16.gmra.mxu0 %v830
      %v872 = vpop.f32.mrf.mxu0
      %v873 = vadd.f32 %v788, %v872
      %v874 = vpop.f32.mrf.mxu0
      %v875 = vadd.f32 %v788, %v874
      %876 = vmatmul.bf16.gmra.mxu0 %v833
      %v877 = vpop.f32.mrf.mxu0
      %v878 = vadd.f32 %v788, %v877
      %v879 = vpop.f32.mrf.mxu0
      %v880 = vadd.f32 %v788, %v879
      %881 = vmatmul.bf16.gmra.mxu0 %v836
      %v882 = vpop.f32.mrf.mxu0
      %v883 = vadd.f32 %v788, %v882
      %v884 = vpop.f32.mrf.mxu0
      %v885 = vadd.f32 %v788, %v884
      %886 = vdwg.mxu0
      %vm887 = vcmask 23552
      %888 = vst.msk [vmem:[%s334] sm:$0xff] %vm887, %v848
      %889 = vst.msk [vmem:[%s334 + $0x8] sm:$0xff] %vm887, %v850
      %890 = vst.msk [vmem:[%s334 + $0x10] sm:$0xff] %vm887, %v853
      %891 = vst.msk [vmem:[%s334 + $0x18] sm:$0xff] %vm887, %v855
      %892 = vst.msk [vmem:[%s334 + $0x20] sm:$0xff] %vm887, %v858
      %893 = vst.msk [vmem:[%s334 + $0x28] sm:$0xff] %vm887, %v860
      %894 = vst.msk [vmem:[%s334 + $0x30] sm:$0xff] %vm887, %v863
      %895 = vst.msk [vmem:[%s334 + $0x38] sm:$0xff] %vm887, %v865
      %896 = vst.msk [vmem:[%s334 + $0x40] sm:$0xff] %vm887, %v868
      %897 = vst.msk [vmem:[%s334 + $0x48] sm:$0xff] %vm887, %v870
      %898 = vst.msk [vmem:[%s334 + $0x50] sm:$0xff] %vm887, %v873
      %899 = vst.msk [vmem:[%s334 + $0x58] sm:$0xff] %vm887, %v875
      %900 = vst.msk [vmem:[%s334 + $0x60] sm:$0xff] %vm887, %v878
      %901 = vst.msk [vmem:[%s334 + $0x68] sm:$0xff] %vm887, %v880
      %902 = vst.msk [vmem:[%s334 + $0x70] sm:$0xff] %vm887, %v883
      %903 = vst.msk [vmem:[%s334 + $0x78] sm:$0xff] %vm887, %v885
      %s904 = smul.u32 16, %s20
      %p905 = scmp.lt.s32.totalorder %s904, 31
      %s906 = scalar_select %p905, %s904, 31
      %s907 = smul.addr %s906, 8
      %s908 = scalar_lea.vmem %s9, %s907
      // Predicated region
      $region57: #{tpu_custom_call.1} parent=55 // pred_check
        %p909 = pneg %p232
      $region58: #{tpu_custom_call.1} parent=55 // pred_check_branch
        %911 = sbr.rel (%p909) target = $region60
      $region59: #{tpu_custom_call.1} parent=55 // pred_region
        %s912 = smul.u32 16, %s20
      $region60: #{tpu_custom_call.1} parent=55 // pred_fallthru
        _
    $region56: #{tpu_custom_call.1} parent=5 // pred_fallthru
      _
    %p913 = scmp.le.s32.totalorder 2, %s15
    // Predicated region
    $region61: #{tpu_custom_call.1} parent=5 // pred_check
      %p914 = pneg %p913
    $region62: #{tpu_custom_call.1} parent=5 // pred_check_branch
      %916 = sbr.rel (%p914) target = $region64
    $region63: #{tpu_custom_call.1} parent=5 // pred_region
      %s917 = ssub.s32 %s15, 2
      // Predicated region
      $region65: #{tpu_custom_call.1} parent=63 // pred_check
        %p918 = pneg %p238
      $region66: #{tpu_custom_call.1} parent=63 // pred_check_branch
        %920 = sbr.rel (%p918) target = $region68
      $region67: #{tpu_custom_call.1} parent=63 // pred_region
        %s921 = smul.u32 16, %s21
        %p922 = scmp.lt.s32.totalorder %s921, 31
        %s923 = scalar_select %p922, %s921, 31
        %s924 = smul.addr %s923, 8
        %s925 = scalar_lea.vmem %s9, %s924
      $region68: #{tpu_custom_call.1} parent=63 // pred_fallthru
        _
    $region64: #{tpu_custom_call.1} parent=5 // pred_fallthru
      _
  $region6: #{tpu_custom_call.1} parent=0 // loop_footer
    %s19 = sadd.s32 1, %s15
  $region7: #{tpu_custom_call.1} parent=0 // loop_footer_branch
    %14 = sbr.rel target = $region3
  $region8: #{tpu_custom_call.1} parent=0 // loop_exit
    _

</llo_original>
